<compile_context>
chip_gen: v7x
topology: tpu7x:2x2x1
jax: 0.10.0
libtpu: 0.0.40
codegen_flags: <defaults>
</compile_context>

<pallas_src>
import functools

import jax
import jax.numpy as jnp
from jax.experimental import pallas as pl
from jax.experimental.pallas import tpu as pltpu


def _unetconv_kernel(x_ref, w1t_ref, b1_ref, w2t_ref, b2_ref,
                     sw1_ref, sb1_ref, sw2t_ref, sb2_ref, o_ref, *, H, W):
    # x_ref:    (1, Cin, H*W) bf16   flattened-NCHW block (one image per step)
    # w1t_ref:  (Cm, 9*Cin)  bf16    b1_ref:  (Cm, 1) f32
    # w2t_ref:  (Co, 9*Cm)   bf16    b2_ref:  (Co, 1) f32
    # sw1_ref:  (Co, Cr) f32         sb1_ref: (1, Cr) f32
    # sw2t_ref: (Co, Cr) f32         sb2_ref: (Co, 1) f32
    # o_ref:    (1, Co, H2*W2) f32   lane-dense, == NCHW after wrapper reshape
    Cin = x_ref.shape[1]
    Cm = w1t_ref.shape[0]
    Co = w2t_ref.shape[0]
    H1, W1 = H - 2, W - 2        # after conv1 (VALID 3x3)
    H2, W2 = H - 4, W - 4        # after conv2 (VALID 3x3)
    L1 = H1 * W - 2              # flat (width-uncompacted) conv1 output length
    L2 = H2 * W - 4              # flat (width-uncompacted) conv2 output length

    x2d = x_ref[0]               # (Cin, H*W) bf16, channels on sublanes

    # ---- conv1: im2col (9 flat shifted-window slices stacked on the channel
    #      axis) + ONE lane-dense matmul.  Columns w >= W1 of each output row
    #      are junk but finite; they never feed a valid conv2 output.
    p1 = jnp.concatenate(
        [x2d[:, kh * W + kw: kh * W + kw + L1]
         for kh in range(3) for kw in range(3)],
        axis=0)                                             # (9*Cin, L1) bf16
    a1 = jnp.dot(w1t_ref[...], p1,
                 preferred_element_type=jnp.float32)        # (Cm, L1) f32
    a1 = a1 + b1_ref[...]
    h1 = jnp.maximum(a1, 0.1 * a1).astype(jnp.bfloat16)     # LeakyReLU(0.1)

    # ---- conv2: same trick, ONE matmul
    p2 = jnp.concatenate(
        [h1[:, kh * W + kw: kh * W + kw + L2]
         for kh in range(3) for kw in range(3)],
        axis=0)                                             # (9*Cm, L2) bf16
    a2 = jnp.dot(w2t_ref[...], p2,
                 preferred_element_type=jnp.float32)        # (Co, L2) f32
    a2 = a2 + b2_ref[...]
    z = jnp.maximum(a2, 0.1 * a2)                           # LeakyReLU(0.1)

    # ---- drop the junk columns: compact to (Co, H2*W2) (already NCHW order)
    zc = jnp.concatenate(
        [z[:, h * W: h * W + W2] for h in range(H2)], axis=1)   # (Co, H2*W2)

    # ---- SEBlock: global average pool (lane reduce) + two tiny matvecs on the
    #      VPU/XLU + sigmoid on the EUP; channel scale broadcast over lanes.
    pooled = jnp.mean(zc, axis=1, keepdims=True)            # (Co, 1)
    s = jnp.sum(sw1_ref[...] * pooled, axis=0, keepdims=True)   # (1, Cr)
    s = jnp.maximum(s + sb1_ref[...], 0.0)                  # ReLU
    scale = jnp.sum(sw2t_ref[...] * s, axis=1, keepdims=True)   # (Co, 1)
    scale = jax.nn.sigmoid(scale + sb2_ref[...])            # (Co, 1)

    # ---- single lane-dense store
    o_ref[0, :, :] = (zc * scale).astype(o_ref.dtype)


def unetconv_forward(x_nchw, params):
    """x_nchw: (N, Cin, H, W) float32.  Returns (N, Co, H-4, W-4) float32."""
    w1, b1, w2, b2, sw1, sb1, sw2, sb2 = params
    N, Cin, H, W = x_nchw.shape
    Cm = w1.shape[-1]
    Co = w2.shape[-1]
    Cr = sw1.shape[-1]
    H2, W2 = H - 4, W - 4

    # Flattened NCHW straight into the kernel: row-major reshape is free, and
    # there is no wrapper-side transpose at all.  Matmul operands in bf16
    # (f32 accumulation happens inside the kernel).
    x_flat = x_nchw.reshape(N, Cin, H * W).astype(jnp.bfloat16)
    w1t = jnp.transpose(w1.reshape(9 * Cin, Cm)).astype(jnp.bfloat16)   # (Cm, 9*Cin)
    w2t = jnp.transpose(w2.reshape(9 * Cm, Co)).astype(jnp.bfloat16)    # (Co, 9*Cm)
    b1c = b1.reshape(Cm, 1).astype(jnp.float32)
    b2c = b2.reshape(Co, 1).astype(jnp.float32)
    sw1c = sw1.astype(jnp.float32)                                      # (Co, Cr)
    sb1r = sb1.reshape(1, Cr).astype(jnp.float32)
    sw2t = jnp.transpose(sw2).astype(jnp.float32)                       # (Co, Cr)
    sb2c = sb2.reshape(Co, 1).astype(jnp.float32)

    full = lambda shape: pl.BlockSpec(shape, lambda b: (0,) * len(shape))

    out_flat = pl.pallas_call(
        functools.partial(_unetconv_kernel, H=H, W=W),
        out_shape=jax.ShapeDtypeStruct((N, Co, H2 * W2), jnp.float32),
        grid_spec=pltpu.PrefetchScalarGridSpec(
            num_scalar_prefetch=0,
            grid=(N,),                      # >= 2 steps for N >= 2: pipelining
            in_specs=[                      # + megacore sharding on v7x
                pl.BlockSpec((1, Cin, H * W), lambda b: (b, 0, 0)),
                full((Cm, 9 * Cin)),
                full((Cm, 1)),
                full((Co, 9 * Cm)),
                full((Co, 1)),
                full((Co, Cr)),
                full((1, Cr)),
                full((Co, Cr)),
                full((Co, 1)),
            ],
            out_specs=pl.BlockSpec((1, Co, H2 * W2), lambda b: (b, 0, 0)),
        ),
        compiler_params=pltpu.CompilerParams(
            dimension_semantics=("parallel",)),   # batch images are independent
    )(x_flat, w1t, b1c, w2t, b2c, sw1c, sb1r, sw2t, sb2c)

    # (N, Co, H2*W2) -> (N, Co, H2, W2): row-major reshape, no data movement.
    return out_flat.reshape(N, Co, H2, W2)


def reference_forward(x_nchw, params):
    """Pure-JAX f32 reference mirroring the PyTorch module (NCHW / OIHW)."""
    w1, b1, w2, b2, sw1, sb1, sw2, sb2 = params
    w1_oihw = jnp.transpose(w1, (3, 2, 0, 1))
    w2_oihw = jnp.transpose(w2, (3, 2, 0, 1))

    def conv(x, w, b):
        y = jax.lax.conv_general_dilated(
            x, w, window_strides=(1, 1), padding='VALID',
            dimension_numbers=('NCHW', 'OIHW', 'NCHW'))
        return y + b[None, :, None, None]

    lrelu = lambda v: jnp.where(v > 0, v, 0.1 * v)
    z = lrelu(conv(x_nchw, w1_oihw, b1))
    z = lrelu(conv(z, w2_oihw, b2))
    pooled = jnp.mean(z, axis=(2, 3))                 # (N, Co)
    s = jnp.maximum(pooled @ sw1 + sb1, 0.0)
    s = jax.nn.sigmoid(s @ sw2 + sb2)                 # (N, Co)
    return z * s[:, :, None, None]


def make_params(key, in_channels, mid_channels, out_channels, reduction=8):
    cr = out_channels // reduction
    ks = jax.random.split(key, 8)
    scale = 0.1
    w1 = scale * jax.random.normal(ks[0], (3, 3, in_channels, mid_channels), jnp.float32)
    b1 = scale * jax.random.normal(ks[1], (mid_channels,), jnp.float32)
    w2 = scale * jax.random.normal(ks[2], (3, 3, mid_channels, out_channels), jnp.float32)
    b2 = scale * jax.random.normal(ks[3], (out_channels,), jnp.float32)
    sw1 = scale * jax.random.normal(ks[4], (out_channels, cr), jnp.float32)
    sb1 = scale * jax.random.normal(ks[5], (cr,), jnp.float32)
    sw2 = scale * jax.random.normal(ks[6], (cr, out_channels), jnp.float32)
    sb2 = scale * jax.random.normal(ks[7], (out_channels,), jnp.float32)
    return (w1, b1, w2, b2, sw1, sb1, sw2, sb2)


if __name__ == "__main__":
    key = jax.random.PRNGKey(0)
    k_x, k_p = jax.random.split(key)

    N, Cin, H, W = 2, 4, 16, 16
    Cm, Co = 8, 16          # out_channels divisible by reduction=8 -> Cr=2

    x = jax.random.normal(k_x, (N, Cin, H, W), jnp.float32)
    params = make_params(k_p, Cin, Cm, Co, reduction=8)

    out = unetconv_forward(x, params)
    out = jax.block_until_ready(out)

    ref = jax.block_until_ready(reference_forward(x, params))
    assert out.shape == (N, Co, H - 4, W - 4), out.shape
    # bf16 MXU operands with f32 accumulation -> loosened tolerance vs f32 ref.
    assert jnp.allclose(out, ref, atol=3e-2, rtol=3e-2), (
        float(jnp.max(jnp.abs(out - ref))))

    print("KERNEL_OK")
</pallas_src>

<mosaic_0001>
module attributes {stable_mosaic.version = 11 : i64} {
  func.func @_unetconv_kernel(%arg0: i32, %arg1: memref<1x4x256xbf16, #tpu.memory_space<vmem>>, %arg2: memref<8x36xbf16, #tpu.memory_space<vmem>>, %arg3: memref<8x1xf32, #tpu.memory_space<vmem>>, %arg4: memref<16x72xbf16, #tpu.memory_space<vmem>>, %arg5: memref<16x1xf32, #tpu.memory_space<vmem>>, %arg6: memref<16x2xf32, #tpu.memory_space<vmem>>, %arg7: memref<1x2xf32, #tpu.memory_space<vmem>>, %arg8: memref<16x2xf32, #tpu.memory_space<vmem>>, %arg9: memref<16x1xf32, #tpu.memory_space<vmem>>, %arg10: memref<1x16x144xf32, #tpu.memory_space<vmem>>) attributes {dimension_semantics = [#tpu.dimension_semantics<parallel>], iteration_bounds = array<i64: 2>, scalar_prefetch = 0 : i64, scratch_operands = 0 : i64, tpu.core_type = #tpu.core_type<tc>, window_params = [{transform_indices = @transform_0, window_bounds = array<i64: 1, 4, 256>}, {pipeline_mode = #tpu.pipeline_mode<synchronous>, transform_indices = @transform_1, window_bounds = array<i64: 8, 36>}, {pipeline_mode = #tpu.pipeline_mode<synchronous>, transform_indices = @transform_2, window_bounds = array<i64: 8, 1>}, {pipeline_mode = #tpu.pipeline_mode<synchronous>, transform_indices = @transform_3, window_bounds = array<i64: 16, 72>}, {pipeline_mode = #tpu.pipeline_mode<synchronous>, transform_indices = @transform_4, window_bounds = array<i64: 16, 1>}, {pipeline_mode = #tpu.pipeline_mode<synchronous>, transform_indices = @transform_5, window_bounds = array<i64: 16, 2>}, {pipeline_mode = #tpu.pipeline_mode<synchronous>, transform_indices = @transform_6, window_bounds = array<i64: 1, 2>}, {pipeline_mode = #tpu.pipeline_mode<synchronous>, transform_indices = @transform_7, window_bounds = array<i64: 16, 2>}, {pipeline_mode = #tpu.pipeline_mode<synchronous>, transform_indices = @transform_8, window_bounds = array<i64: 16, 1>}, {transform_indices = @transform_9, window_bounds = array<i64: 1, 16, 144>}]} {
    %c0 = arith.constant 0 : index
    %c0_0 = arith.constant 0 : index
    %c0_1 = arith.constant 0 : index
    %0 = vector.load %arg1[%c0, %c0_0, %c0_1] : memref<1x4x256xbf16, #tpu.memory_space<vmem>>, vector<1x4x256xbf16>
    %1 = vector.shape_cast %0 : vector<1x4x256xbf16> to vector<4x256xbf16>
    %2 = vector.extract_strided_slice %1 {offsets = [0, 0], sizes = [4, 222], strides = [1, 1]} : vector<4x256xbf16> to vector<4x222xbf16>
    %3 = vector.extract_strided_slice %1 {offsets = [0, 1], sizes = [4, 222], strides = [1, 1]} : vector<4x256xbf16> to vector<4x222xbf16>
    %4 = vector.extract_strided_slice %1 {offsets = [0, 2], sizes = [4, 222], strides = [1, 1]} : vector<4x256xbf16> to vector<4x222xbf16>
    %5 = vector.extract_strided_slice %1 {offsets = [0, 16], sizes = [4, 222], strides = [1, 1]} : vector<4x256xbf16> to vector<4x222xbf16>
    %6 = vector.extract_strided_slice %1 {offsets = [0, 17], sizes = [4, 222], strides = [1, 1]} : vector<4x256xbf16> to vector<4x222xbf16>
    %7 = vector.extract_strided_slice %1 {offsets = [0, 18], sizes = [4, 222], strides = [1, 1]} : vector<4x256xbf16> to vector<4x222xbf16>
    %8 = vector.extract_strided_slice %1 {offsets = [0, 32], sizes = [4, 222], strides = [1, 1]} : vector<4x256xbf16> to vector<4x222xbf16>
    %9 = vector.extract_strided_slice %1 {offsets = [0, 33], sizes = [4, 222], strides = [1, 1]} : vector<4x256xbf16> to vector<4x222xbf16>
    %10 = vector.extract_strided_slice %1 {offsets = [0, 34], sizes = [4, 222], strides = [1, 1]} : vector<4x256xbf16> to vector<4x222xbf16>
    %11 = tpu.concatenate %2, %3, %4, %5, %6, %7, %8, %9, %10 in 0 : vector<4x222xbf16>, vector<4x222xbf16>, vector<4x222xbf16>, vector<4x222xbf16>, vector<4x222xbf16>, vector<4x222xbf16>, vector<4x222xbf16>, vector<4x222xbf16>, vector<4x222xbf16> -> vector<36x222xbf16>
    %c0_2 = arith.constant 0 : index
    %c0_3 = arith.constant 0 : index
    %12 = vector.load %arg2[%c0_2, %c0_3] : memref<8x36xbf16, #tpu.memory_space<vmem>>, vector<8x36xbf16>
    %cst = arith.constant dense<0.000000e+00> : vector<8x222xf32>
    %13 = tpu.matmul %12, %11, %cst {dimension_numbers = #tpu.dot_dimension_numbers<[1], [0], [0], [1], [0, 0, 1, 1], [], []>} : vector<8x36xbf16>, vector<36x222xbf16>, vector<8x222xf32> -> vector<8x222xf32>
    %c0_4 = arith.constant 0 : index
    %c0_5 = arith.constant 0 : index
    %14 = vector.load %arg3[%c0_4, %c0_5] : memref<8x1xf32, #tpu.memory_space<vmem>>, vector<8x1xf32>
    %15 = vector.broadcast %14 : vector<8x1xf32> to vector<8x222xf32>
    %16 = arith.addf %13, %15 : vector<8x222xf32>
    %cst_6 = arith.constant 1.000000e-01 : f32
    %17 = vector.broadcast %cst_6 : f32 to vector<8x222xf32>
    %18 = arith.mulf %17, %16 : vector<8x222xf32>
    %19 = arith.maximumf %16, %18 : vector<8x222xf32>
    %20 = arith.truncf %19 : vector<8x222xf32> to vector<8x222xbf16>
    %21 = vector.extract_strided_slice %20 {offsets = [0, 0], sizes = [8, 188], strides = [1, 1]} : vector<8x222xbf16> to vector<8x188xbf16>
    %22 = vector.extract_strided_slice %20 {offsets = [0, 1], sizes = [8, 188], strides = [1, 1]} : vector<8x222xbf16> to vector<8x188xbf16>
    %23 = vector.extract_strided_slice %20 {offsets = [0, 2], sizes = [8, 188], strides = [1, 1]} : vector<8x222xbf16> to vector<8x188xbf16>
    %24 = vector.extract_strided_slice %20 {offsets = [0, 16], sizes = [8, 188], strides = [1, 1]} : vector<8x222xbf16> to vector<8x188xbf16>
    %25 = vector.extract_strided_slice %20 {offsets = [0, 17], sizes = [8, 188], strides = [1, 1]} : vector<8x222xbf16> to vector<8x188xbf16>
    %26 = vector.extract_strided_slice %20 {offsets = [0, 18], sizes = [8, 188], strides = [1, 1]} : vector<8x222xbf16> to vector<8x188xbf16>
    %27 = vector.extract_strided_slice %20 {offsets = [0, 32], sizes = [8, 188], strides = [1, 1]} : vector<8x222xbf16> to vector<8x188xbf16>
    %28 = vector.extract_strided_slice %20 {offsets = [0, 33], sizes = [8, 188], strides = [1, 1]} : vector<8x222xbf16> to vector<8x188xbf16>
    %29 = vector.extract_strided_slice %20 {offsets = [0, 34], sizes = [8, 188], strides = [1, 1]} : vector<8x222xbf16> to vector<8x188xbf16>
    %30 = tpu.concatenate %21, %22, %23, %24, %25, %26, %27, %28, %29 in 0 : vector<8x188xbf16>, vector<8x188xbf16>, vector<8x188xbf16>, vector<8x188xbf16>, vector<8x188xbf16>, vector<8x188xbf16>, vector<8x188xbf16>, vector<8x188xbf16>, vector<8x188xbf16> -> vector<72x188xbf16>
    %c0_7 = arith.constant 0 : index
    %c0_8 = arith.constant 0 : index
    %31 = vector.load %arg4[%c0_7, %c0_8] : memref<16x72xbf16, #tpu.memory_space<vmem>>, vector<16x72xbf16>
    %cst_9 = arith.constant dense<0.000000e+00> : vector<16x188xf32>
    %32 = tpu.matmul %31, %30, %cst_9 {dimension_numbers = #tpu.dot_dimension_numbers<[1], [0], [0], [1], [0, 0, 1, 1], [], []>} : vector<16x72xbf16>, vector<72x188xbf16>, vector<16x188xf32> -> vector<16x188xf32>
    %c0_10 = arith.constant 0 : index
    %c0_11 = arith.constant 0 : index
    %33 = vector.load %arg5[%c0_10, %c0_11] : memref<16x1xf32, #tpu.memory_space<vmem>>, vector<16x1xf32>
    %34 = vector.broadcast %33 : vector<16x1xf32> to vector<16x188xf32>
    %35 = arith.addf %32, %34 : vector<16x188xf32>
    %cst_12 = arith.constant 1.000000e-01 : f32
    %36 = vector.broadcast %cst_12 : f32 to vector<16x188xf32>
    %37 = arith.mulf %36, %35 : vector<16x188xf32>
    %38 = arith.maximumf %35, %37 : vector<16x188xf32>
    %39 = vector.extract_strided_slice %38 {offsets = [0, 0], sizes = [16, 12], strides = [1, 1]} : vector<16x188xf32> to vector<16x12xf32>
    %40 = vector.extract_strided_slice %38 {offsets = [0, 16], sizes = [16, 12], strides = [1, 1]} : vector<16x188xf32> to vector<16x12xf32>
    %41 = vector.extract_strided_slice %38 {offsets = [0, 32], sizes = [16, 12], strides = [1, 1]} : vector<16x188xf32> to vector<16x12xf32>
    %42 = vector.extract_strided_slice %38 {offsets = [0, 48], sizes = [16, 12], strides = [1, 1]} : vector<16x188xf32> to vector<16x12xf32>
    %43 = vector.extract_strided_slice %38 {offsets = [0, 64], sizes = [16, 12], strides = [1, 1]} : vector<16x188xf32> to vector<16x12xf32>
    %44 = vector.extract_strided_slice %38 {offsets = [0, 80], sizes = [16, 12], strides = [1, 1]} : vector<16x188xf32> to vector<16x12xf32>
    %45 = vector.extract_strided_slice %38 {offsets = [0, 96], sizes = [16, 12], strides = [1, 1]} : vector<16x188xf32> to vector<16x12xf32>
    %46 = vector.extract_strided_slice %38 {offsets = [0, 112], sizes = [16, 12], strides = [1, 1]} : vector<16x188xf32> to vector<16x12xf32>
    %47 = vector.extract_strided_slice %38 {offsets = [0, 128], sizes = [16, 12], strides = [1, 1]} : vector<16x188xf32> to vector<16x12xf32>
    %48 = vector.extract_strided_slice %38 {offsets = [0, 144], sizes = [16, 12], strides = [1, 1]} : vector<16x188xf32> to vector<16x12xf32>
    %49 = vector.extract_strided_slice %38 {offsets = [0, 160], sizes = [16, 12], strides = [1, 1]} : vector<16x188xf32> to vector<16x12xf32>
    %50 = vector.extract_strided_slice %38 {offsets = [0, 176], sizes = [16, 12], strides = [1, 1]} : vector<16x188xf32> to vector<16x12xf32>
    %51 = tpu.concatenate %39, %40, %41, %42, %43, %44, %45, %46, %47, %48, %49, %50 in 1 : vector<16x12xf32>, vector<16x12xf32>, vector<16x12xf32>, vector<16x12xf32>, vector<16x12xf32>, vector<16x12xf32>, vector<16x12xf32>, vector<16x12xf32>, vector<16x12xf32>, vector<16x12xf32>, vector<16x12xf32>, vector<16x12xf32> -> vector<16x144xf32>
    %cst_13 = arith.constant dense<0.000000e+00> : vector<16xf32>
    %52 = vector.multi_reduction <add>, %51, %cst_13 [1] : vector<16x144xf32> to vector<16xf32>
    %53 = vector.shape_cast %52 : vector<16xf32> to vector<16x1xf32>
    %cst_14 = arith.constant 1.440000e+02 : f32
    %54 = vector.broadcast %cst_14 : f32 to vector<16x1xf32>
    %55 = arith.divf %53, %54 : vector<16x1xf32>
    %c0_15 = arith.constant 0 : index
    %c0_16 = arith.constant 0 : index
    %56 = vector.load %arg6[%c0_15, %c0_16] : memref<16x2xf32, #tpu.memory_space<vmem>>, vector<16x2xf32>
    %57 = vector.broadcast %55 : vector<16x1xf32> to vector<16x2xf32>
    %58 = arith.mulf %56, %57 : vector<16x2xf32>
    %cst_17 = arith.constant dense<0.000000e+00> : vector<2xf32>
    %59 = vector.multi_reduction <add>, %58, %cst_17 [0] : vector<16x2xf32> to vector<2xf32>
    %60 = vector.shape_cast %59 : vector<2xf32> to vector<1x2xf32>
    %c0_18 = arith.constant 0 : index
    %c0_19 = arith.constant 0 : index
    %61 = vector.load %arg7[%c0_18, %c0_19] : memref<1x2xf32, #tpu.memory_space<vmem>>, vector<1x2xf32>
    %62 = arith.addf %60, %61 : vector<1x2xf32>
    %cst_20 = arith.constant 0.000000e+00 : f32
    %63 = vector.broadcast %cst_20 : f32 to vector<1x2xf32>
    %64 = arith.maximumf %62, %63 : vector<1x2xf32>
    %c0_21 = arith.constant 0 : index
    %c0_22 = arith.constant 0 : index
    %65 = vector.load %arg8[%c0_21, %c0_22] : memref<16x2xf32, #tpu.memory_space<vmem>>, vector<16x2xf32>
    %66 = vector.broadcast %64 : vector<1x2xf32> to vector<16x2xf32>
    %67 = arith.mulf %65, %66 : vector<16x2xf32>
    %cst_23 = arith.constant dense<0.000000e+00> : vector<16xf32>
    %68 = vector.multi_reduction <add>, %67, %cst_23 [1] : vector<16x2xf32> to vector<16xf32>
    %69 = vector.shape_cast %68 : vector<16xf32> to vector<16x1xf32>
    %c0_24 = arith.constant 0 : index
    %c0_25 = arith.constant 0 : index
    %70 = vector.load %arg9[%c0_24, %c0_25] : memref<16x1xf32, #tpu.memory_space<vmem>>, vector<16x1xf32>
    %71 = arith.addf %69, %70 : vector<16x1xf32>
    %72 = arith.negf %71 : vector<16x1xf32>
    %73 = math.exp %72 : vector<16x1xf32>
    %cst_26 = arith.constant 1.000000e+00 : f32
    %74 = vector.broadcast %cst_26 : f32 to vector<16x1xf32>
    %75 = arith.addf %74, %73 : vector<16x1xf32>
    %76 = arith.divf %74, %75 : vector<16x1xf32>
    %77 = vector.broadcast %76 : vector<16x1xf32> to vector<16x144xf32>
    %78 = arith.mulf %51, %77 : vector<16x144xf32>
    %c0_27 = arith.constant 0 : index
    %c0_28 = arith.constant 0 : index
    %c0_29 = arith.constant 0 : index
    %79 = vector.load %arg10[%c0_27, %c0_28, %c0_29] : memref<1x16x144xf32, #tpu.memory_space<vmem>>, vector<1x16x144xf32>
    %80 = vector.shape_cast %79 : vector<1x16x144xf32> to vector<16x144xf32>
    %81 = vector.shape_cast %78 : vector<16x144xf32> to vector<1x16x144xf32>
    tpu.vector_store %arg10[%c0_27, %c0_28, %c0_29], %81 {strides = array<i32>} : memref<1x16x144xf32, #tpu.memory_space<vmem>>, vector<1x16x144xf32>,
    return
  }
  func.func @transform_0(%arg0: i32) -> (i32, i32, i32) {
    %c0_i32 = arith.constant 0 : i32
    %c0_i32_0 = arith.constant 0 : i32
    %c0_i32_1 = arith.constant 0 : i32
    return %arg0, %c0_i32, %c0_i32_0 : i32, i32, i32
  }
  func.func @transform_1(%arg0: i32) -> (i32, i32) {
    %c0_i32 = arith.constant 0 : i32
    %c0_i32_0 = arith.constant 0 : i32
    %c0_i32_1 = arith.constant 0 : i32
    return %c0_i32, %c0_i32_0 : i32, i32
  }
  func.func @transform_2(%arg0: i32) -> (i32, i32) {
    %c0_i32 = arith.constant 0 : i32
    %c0_i32_0 = arith.constant 0 : i32
    %c0_i32_1 = arith.constant 0 : i32
    return %c0_i32, %c0_i32_0 : i32, i32
  }
  func.func @transform_3(%arg0: i32) -> (i32, i32) {
    %c0_i32 = arith.constant 0 : i32
    %c0_i32_0 = arith.constant 0 : i32
    %c0_i32_1 = arith.constant 0 : i32
    return %c0_i32, %c0_i32_0 : i32, i32
  }
  func.func @transform_4(%arg0: i32) -> (i32, i32) {
    %c0_i32 = arith.constant 0 : i32
    %c0_i32_0 = arith.constant 0 : i32
    %c0_i32_1 = arith.constant 0 : i32
    return %c0_i32, %c0_i32_0 : i32, i32
  }
  func.func @transform_5(%arg0: i32) -> (i32, i32) {
    %c0_i32 = arith.constant 0 : i32
    %c0_i32_0 = arith.constant 0 : i32
    %c0_i32_1 = arith.constant 0 : i32
    return %c0_i32, %c0_i32_0 : i32, i32
  }
  func.func @transform_6(%arg0: i32) -> (i32, i32) {
    %c0_i32 = arith.constant 0 : i32
    %c0_i32_0 = arith.constant 0 : i32
    %c0_i32_1 = arith.constant 0 : i32
    return %c0_i32, %c0_i32_0 : i32, i32
  }
  func.func @transform_7(%arg0: i32) -> (i32, i32) {
    %c0_i32 = arith.constant 0 : i32
    %c0_i32_0 = arith.constant 0 : i32
    %c0_i32_1 = arith.constant 0 : i32
    return %c0_i32, %c0_i32_0 : i32, i32
  }
  func.func @transform_8(%arg0: i32) -> (i32, i32) {
    %c0_i32 = arith.constant 0 : i32
    %c0_i32_0 = arith.constant 0 : i32
    %c0_i32_1 = arith.constant 0 : i32
    return %c0_i32, %c0_i32_0 : i32, i32
  }
  func.func @transform_9(%arg0: i32) -> (i32, i32, i32) {
    %c0_i32 = arith.constant 0 : i32
    %c0_i32_0 = arith.constant 0 : i32
    %c0_i32_1 = arith.constant 0 : i32
    return %arg0, %c0_i32, %c0_i32_0 : i32, i32, i32
  }
}

</mosaic_0001>

<llo_original>
// kernel: tpu_custom_call.1
$region0: #{tpu_custom_call.1}
  #allocation0 [shape = 'u32[]', space=smem, size = 0x4, offset = 0x4, fixed_abs, tag = 'smem constant byte address 0x4 - core index']
  #allocation1 [shape = 'u32[144,128]{1,0:T(1,128)}', space=vmem, size = 0x12000, scoped, tag = 'internal scratch']
  %s0 = inlined_call_operand.vmem [shape: bf16[2,4,256], index: 0, kind: input, shape index: {}]
  %s1 = inlined_call_operand.vmem [shape: bf16[8,36], index: 1, kind: input, shape index: {}]
  %s2 = inlined_call_operand.vmem [shape: f32[8,1], index: 2, kind: input, shape index: {}]
  %s3 = inlined_call_operand.vmem [shape: bf16[16,72], index: 3, kind: input, shape index: {}]
  %s4 = inlined_call_operand.vmem [shape: f32[16,1], index: 4, kind: input, shape index: {}]
  %s5 = inlined_call_operand.vmem [shape: f32[16,2], index: 5, kind: input, shape index: {}]
  %s6 = inlined_call_operand.vmem [shape: f32[1,2], index: 6, kind: input, shape index: {}]
  %s7 = inlined_call_operand.vmem [shape: f32[16,2], index: 7, kind: input, shape index: {}]
  %s8 = inlined_call_operand.vmem [shape: f32[16,1], index: 8, kind: input, shape index: {}]
  %s9 = inlined_call_operand.hbm [shape: f32[2,16,144], index: 9, kind: output, shape index: {}]
  %s10 = sld [smem:[#allocation0]]
  $region69: #{tpu_custom_call.1} parent=0
    _
  %s12 = ssub.s32 1, %s10
  %s13 = scalar_select 0, %s12, %s10
  $region1: #{tpu_custom_call.1} parent=0
    #allocation2 [shape = 'u8[32768]{0}', space=vmem, size = 0x8000, scoped, tag = 'output window, operand 0']
    #allocation3 [shape = 's32[2]{0}', space=sflag, size = 0x8, scoped, tag = 'scoped memory for tpu_custom_call.1']
    %14 = vsyncpa [#allocation3], 0
    %s15 = scalar_lea.sflag [#allocation3], 1
    %16 = vsyncpa %s15, 0
    loop: start=0, step=1, limit=4
    $region2: #{tpu_custom_call.1} parent=1 // loop_pre_header
      _
    $region3: #{tpu_custom_call.1} parent=1 // loop_header
      %s18 = sphi 0, %s22
      %p19 = scmp.ge.s32.totalorder %s18, 4
      %s28 = sphi 0, %s30
      %s31 = sphi 0, %s28
      %s32 = sphi 0, %s31
      %s48 = sphi 0, %s32
      %s52 = sphi 0, %s52
      %s54 = sphi 0, %s52
      %s55 = sphi 0, %s54
      %s69 = sphi 0, %s55
      %s73 = sphi 0, %s73
      %s75 = sphi 0, %s73
      %s76 = sphi 0, %s75
      %s90 = sphi 0, %s76
      %s94 = sphi 0, %s94
      %s96 = sphi 0, %s94
      %s97 = sphi 0, %s96
      %s111 = sphi 0, %s97
      %s115 = sphi 0, %s115
      %s117 = sphi 0, %s115
      %s118 = sphi 0, %s117
      %s132 = sphi 0, %s118
      %s136 = sphi 0, %s136
      %s138 = sphi 0, %s136
      %s139 = sphi 0, %s138
      %s153 = sphi 0, %s139
      %s157 = sphi 0, %s157
      %s159 = sphi 0, %s157
      %s160 = sphi 0, %s159
      %s174 = sphi 0, %s160
      %s178 = sphi 0, %s178
      %s180 = sphi 0, %s178
      %s181 = sphi 0, %s180
      %s195 = sphi 0, %s181
      %s199 = sphi 0, %s199
      %s201 = sphi 0, %s199
      %s202 = sphi 0, %s201
      %s216 = sphi 0, %s202
      %s222 = sphi 0, %s224
      %s225 = sphi 0, %s222
      %s226 = sphi 0, %s225
      %s242 = sphi 0, %s226
    $region4: #{tpu_custom_call.1} parent=1 // loop_header_branch
      %21 = sbr.rel (%p19) target = $region8
    $region5: #{tpu_custom_call.1} parent=1 // loop_body
      %s23 = ssub.s32 %s18, 1
      %s24 = ssub.s32 %s18, 2
      %s25 = sadd.s32 %s18, 1
      %s26 = ssub.s32 %s18, %s25
      %p27 = scmp.eq.s32.totalorder %s26, 0
      %s29 = sadd.s32 %s28, 1
      %s30 = scalar_select %p27, %s28, %s29
      %p33 = pneg %p27
      %p34 = scmp.eq.s32.totalorder %s18, 1
      %p35 = por %p33, %p34
      %p36 = scmp.ne.s32.totalorder %s28, %s31
      %p37 = scmp.eq.s32.totalorder %s18, 0
      %p38 = por %p36, %p37
      %p39 = scmp.ne.s32.totalorder %s28, %s31
      %p40 = scmp.eq.s32.totalorder %s23, 1
      %p41 = por %p39, %p40
      %p42 = scmp.ne.s32.totalorder %s31, %s32
      %p43 = scmp.eq.s32.totalorder %s23, 0
      %p44 = por %p42, %p43
      %p45 = scmp.ne.s32.totalorder %s31, %s32
      %p46 = scmp.eq.s32.totalorder %s24, 1
      %p47 = por %p45, %p46
      %p49 = scmp.ne.s32.totalorder %s32, %s48
      %p50 = scmp.eq.s32.totalorder %s24, 0
      %p51 = por %p49, %p50
      %s53 = sadd.s32 %s52, 1
      %p56 = scmp.eq.s32.totalorder %s18, 1
      %p57 = scmp.ne.s32.totalorder %s52, %s54
      %p58 = scmp.eq.s32.totalorder %s18, 0
      %p59 = por %p57, %p58
      %p60 = scmp.ne.s32.totalorder %s52, %s54
      %p61 = scmp.eq.s32.totalorder %s23, 1
      %p62 = por %p60, %p61
      %p63 = scmp.ne.s32.totalorder %s54, %s55
      %p64 = scmp.eq.s32.totalorder %s23, 0
      %p65 = por %p63, %p64
      %p66 = scmp.ne.s32.totalorder %s54, %s55
      %p67 = scmp.eq.s32.totalorder %s24, 1
      %p68 = por %p66, %p67
      %p70 = scmp.ne.s32.totalorder %s55, %s69
      %p71 = scmp.eq.s32.totalorder %s24, 0
      %p72 = por %p70, %p71
      %s74 = sadd.s32 %s73, 1
      %p77 = scmp.eq.s32.totalorder %s18, 1
      %p78 = scmp.ne.s32.totalorder %s73, %s75
      %p79 = scmp.eq.s32.totalorder %s18, 0
      %p80 = por %p78, %p79
      %p81 = scmp.ne.s32.totalorder %s73, %s75
      %p82 = scmp.eq.s32.totalorder %s23, 1
      %p83 = por %p81, %p82
      %p84 = scmp.ne.s32.totalorder %s75, %s76
      %p85 = scmp.eq.s32.totalorder %s23, 0
      %p86 = por %p84, %p85
      %p87 = scmp.ne.s32.totalorder %s75, %s76
      %p88 = scmp.eq.s32.totalorder %s24, 1
      %p89 = por %p87, %p88
      %p91 = scmp.ne.s32.totalorder %s76, %s90
      %p92 = scmp.eq.s32.totalorder %s24, 0
      %p93 = por %p91, %p92
      %s95 = sadd.s32 %s94, 1
      %p98 = scmp.eq.s32.totalorder %s18, 1
      %p99 = scmp.ne.s32.totalorder %s94, %s96
      %p100 = scmp.eq.s32.totalorder %s18, 0
      %p101 = por %p99, %p100
      %p102 = scmp.ne.s32.totalorder %s94, %s96
      %p103 = scmp.eq.s32.totalorder %s23, 1
      %p104 = por %p102, %p103
      %p105 = scmp.ne.s32.totalorder %s96, %s97
      %p106 = scmp.eq.s32.totalorder %s23, 0
      %p107 = por %p105, %p106
      %p108 = scmp.ne.s32.totalorder %s96, %s97
      %p109 = scmp.eq.s32.totalorder %s24, 1
      %p110 = por %p108, %p109
      %p112 = scmp.ne.s32.totalorder %s97, %s111
      %p113 = scmp.eq.s32.totalorder %s24, 0
      %p114 = por %p112, %p113
      %s116 = sadd.s32 %s115, 1
      %p119 = scmp.eq.s32.totalorder %s18, 1
      %p120 = scmp.ne.s32.totalorder %s115, %s117
      %p121 = scmp.eq.s32.totalorder %s18, 0
      %p122 = por %p120, %p121
      %p123 = scmp.ne.s32.totalorder %s115, %s117
      %p124 = scmp.eq.s32.totalorder %s23, 1
      %p125 = por %p123, %p124
      %p126 = scmp.ne.s32.totalorder %s117, %s118
      %p127 = scmp.eq.s32.totalorder %s23, 0
      %p128 = por %p126, %p127
      %p129 = scmp.ne.s32.totalorder %s117, %s118
      %p130 = scmp.eq.s32.totalorder %s24, 1
      %p131 = por %p129, %p130
      %p133 = scmp.ne.s32.totalorder %s118, %s132
      %p134 = scmp.eq.s32.totalorder %s24, 0
      %p135 = por %p133, %p134
      %s137 = sadd.s32 %s136, 1
      %p140 = scmp.eq.s32.totalorder %s18, 1
      %p141 = scmp.ne.s32.totalorder %s136, %s138
      %p142 = scmp.eq.s32.totalorder %s18, 0
      %p143 = por %p141, %p142
      %p144 = scmp.ne.s32.totalorder %s136, %s138
      %p145 = scmp.eq.s32.totalorder %s23, 1
      %p146 = por %p144, %p145
      %p147 = scmp.ne.s32.totalorder %s138, %s139
      %p148 = scmp.eq.s32.totalorder %s23, 0
      %p149 = por %p147, %p148
      %p150 = scmp.ne.s32.totalorder %s138, %s139
      %p151 = scmp.eq.s32.totalorder %s24, 1
      %p152 = por %p150, %p151
      %p154 = scmp.ne.s32.totalorder %s139, %s153
      %p155 = scmp.eq.s32.totalorder %s24, 0
      %p156 = por %p154, %p155
      %s158 = sadd.s32 %s157, 1
      %p161 = scmp.eq.s32.totalorder %s18, 1
      %p162 = scmp.ne.s32.totalorder %s157, %s159
      %p163 = scmp.eq.s32.totalorder %s18, 0
      %p164 = por %p162, %p163
      %p165 = scmp.ne.s32.totalorder %s157, %s159
      %p166 = scmp.eq.s32.totalorder %s23, 1
      %p167 = por %p165, %p166
      %p168 = scmp.ne.s32.totalorder %s159, %s160
      %p169 = scmp.eq.s32.totalorder %s23, 0
      %p170 = por %p168, %p169
      %p171 = scmp.ne.s32.totalorder %s159, %s160
      %p172 = scmp.eq.s32.totalorder %s24, 1
      %p173 = por %p171, %p172
      %p175 = scmp.ne.s32.totalorder %s160, %s174
      %p176 = scmp.eq.s32.totalorder %s24, 0
      %p177 = por %p175, %p176
      %s179 = sadd.s32 %s178, 1
      %p182 = scmp.eq.s32.totalorder %s18, 1
      %p183 = scmp.ne.s32.totalorder %s178, %s180
      %p184 = scmp.eq.s32.totalorder %s18, 0
      %p185 = por %p183, %p184
      %p186 = scmp.ne.s32.totalorder %s178, %s180
      %p187 = scmp.eq.s32.totalorder %s23, 1
      %p188 = por %p186, %p187
      %p189 = scmp.ne.s32.totalorder %s180, %s181
      %p190 = scmp.eq.s32.totalorder %s23, 0
      %p191 = por %p189, %p190
      %p192 = scmp.ne.s32.totalorder %s180, %s181
      %p193 = scmp.eq.s32.totalorder %s24, 1
      %p194 = por %p192, %p193
      %p196 = scmp.ne.s32.totalorder %s181, %s195
      %p197 = scmp.eq.s32.totalorder %s24, 0
      %p198 = por %p196, %p197
      %s200 = sadd.s32 %s199, 1
      %p203 = scmp.eq.s32.totalorder %s18, 1
      %p204 = scmp.ne.s32.totalorder %s199, %s201
      %p205 = scmp.eq.s32.totalorder %s18, 0
      %p206 = por %p204, %p205
      %p207 = scmp.ne.s32.totalorder %s199, %s201
      %p208 = scmp.eq.s32.totalorder %s23, 1
      %p209 = por %p207, %p208
      %p210 = scmp.ne.s32.totalorder %s201, %s202
      %p211 = scmp.eq.s32.totalorder %s23, 0
      %p212 = por %p210, %p211
      %p213 = scmp.ne.s32.totalorder %s201, %s202
      %p214 = scmp.eq.s32.totalorder %s24, 1
      %p215 = por %p213, %p214
      %p217 = scmp.ne.s32.totalorder %s202, %s216
      %p218 = scmp.eq.s32.totalorder %s24, 0
      %p219 = por %p217, %p218
      %s220 = ssub.s32 %s18, %s25
      %p221 = scmp.eq.s32.totalorder %s220, 0
      %s223 = sadd.s32 %s222, 1
      %s224 = scalar_select %p221, %s222, %s223
      %p227 = pneg %p221
      %p228 = scmp.eq.s32.totalorder %s18, 1
      %p229 = por %p227, %p228
      %p230 = scmp.ne.s32.totalorder %s222, %s225
      %p231 = scmp.eq.s32.totalorder %s18, 0
      %p232 = por %p230, %p231
      %p233 = scmp.ne.s32.totalorder %s222, %s225
      %p234 = scmp.eq.s32.totalorder %s23, 1
      %p235 = por %p233, %p234
      %p236 = scmp.ne.s32.totalorder %s225, %s226
      %p237 = scmp.eq.s32.totalorder %s23, 0
      %p238 = por %p236, %p237
      %p239 = scmp.ne.s32.totalorder %s225, %s226
      %p240 = scmp.eq.s32.totalorder %s24, 1
      %p241 = por %p239, %p240
      %p243 = scmp.ne.s32.totalorder %s226, %s242
      %p244 = scmp.eq.s32.totalorder %s24, 0
      %p245 = por %p243, %p244
      %p246 = scmp.le.s32.totalorder 1, %s18
      %p247 = scmp.lt.s32.totalorder %s18, 3
      %p248 = pnand %p246, %p247
      %p249 = pneg %p248
      // Predicated region
      $region9: #{tpu_custom_call.1} parent=5 // pred_check
        _
      $region10: #{tpu_custom_call.1} parent=5 // pred_check_branch
        %251 = sbr.rel (%p248) target = $region12
      $region11: #{tpu_custom_call.1} parent=5 // pred_region
        %s252 = ssub.s32 %s18, 1
        // Predicated region
        $region13: #{tpu_custom_call.1} parent=11 // pred_check
          %p253 = pneg %p65
        $region14: #{tpu_custom_call.1} parent=11 // pred_check_branch
          %255 = sbr.rel (%p253) target = $region16
        $region15: #{tpu_custom_call.1} parent=11 // pred_region
          _
        $region16: #{tpu_custom_call.1} parent=11 // pred_fallthru
          _
        // Predicated region
        $region17: #{tpu_custom_call.1} parent=11 // pred_check
          %p256 = pneg %p86
        $region18: #{tpu_custom_call.1} parent=11 // pred_check_branch
          %258 = sbr.rel (%p256) target = $region20
        $region19: #{tpu_custom_call.1} parent=11 // pred_region
          _
        $region20: #{tpu_custom_call.1} parent=11 // pred_fallthru
          _
        // Predicated region
        $region21: #{tpu_custom_call.1} parent=11 // pred_check
          %p259 = pneg %p107
        $region22: #{tpu_custom_call.1} parent=11 // pred_check_branch
          %261 = sbr.rel (%p259) target = $region24
        $region23: #{tpu_custom_call.1} parent=11 // pred_region
          _
        $region24: #{tpu_custom_call.1} parent=11 // pred_fallthru
          _
        // Predicated region
        $region25: #{tpu_custom_call.1} parent=11 // pred_check
          %p262 = pneg %p128
        $region26: #{tpu_custom_call.1} parent=11 // pred_check_branch
          %264 = sbr.rel (%p262) target = $region28
        $region27: #{tpu_custom_call.1} parent=11 // pred_region
          _
        $region28: #{tpu_custom_call.1} parent=11 // pred_fallthru
          _
        // Predicated region
        $region29: #{tpu_custom_call.1} parent=11 // pred_check
          %p265 = pneg %p149
        $region30: #{tpu_custom_call.1} parent=11 // pred_check_branch
          %267 = sbr.rel (%p265) target = $region32
        $region31: #{tpu_custom_call.1} parent=11 // pred_region
          _
        $region32: #{tpu_custom_call.1} parent=11 // pred_fallthru
          _
        // Predicated region
        $region33: #{tpu_custom_call.1} parent=11 // pred_check
          %p268 = pneg %p170
        $region34: #{tpu_custom_call.1} parent=11 // pred_check_branch
          %270 = sbr.rel (%p268) target = $region36
        $region35: #{tpu_custom_call.1} parent=11 // pred_region
          _
        $region36: #{tpu_custom_call.1} parent=11 // pred_fallthru
          _
        // Predicated region
        $region37: #{tpu_custom_call.1} parent=11 // pred_check
          %p271 = pneg %p191
        $region38: #{tpu_custom_call.1} parent=11 // pred_check_branch
          %273 = sbr.rel (%p271) target = $region40
        $region39: #{tpu_custom_call.1} parent=11 // pred_region
          _
        $region40: #{tpu_custom_call.1} parent=11 // pred_fallthru
          _
        // Predicated region
        $region41: #{tpu_custom_call.1} parent=11 // pred_check
          %p274 = pneg %p212
        $region42: #{tpu_custom_call.1} parent=11 // pred_check_branch
          %276 = sbr.rel (%p274) target = $region44
        $region43: #{tpu_custom_call.1} parent=11 // pred_region
          _
        $region44: #{tpu_custom_call.1} parent=11 // pred_fallthru
          _
      $region12: #{tpu_custom_call.1} parent=5 // pred_fallthru
        _
      %p277 = scmp.lt.s32.totalorder %s18, 2
      // Predicated region
      $region45: #{tpu_custom_call.1} parent=5 // pred_check
        %p278 = pneg %p277
      $region46: #{tpu_custom_call.1} parent=5 // pred_check_branch
        %280 = sbr.rel (%p278) target = $region48
      $region47: #{tpu_custom_call.1} parent=5 // pred_region
        // Predicated region
        $region49: #{tpu_custom_call.1} parent=47 // pred_check
          %p281 = pneg %p38
        $region50: #{tpu_custom_call.1} parent=47 // pred_check_branch
          %283 = sbr.rel (%p281) target = $region52
        $region51: #{tpu_custom_call.1} parent=47 // pred_region
          %p284 = scmp.lt.s32.totalorder %s18, 1
          %s285 = scalar_select %p284, %s18, 1
          %s286 = smul.addr %s285, 2
          %s287 = smul.addr %s286, 2
          %s288 = scalar_lea.vmem %s0, %s287
        $region52: #{tpu_custom_call.1} parent=47 // pred_fallthru
          _
      $region48: #{tpu_custom_call.1} parent=5 // pred_fallthru
        _
      %p289 = scmp.le.s32.totalorder 1, %s18
      %p290 = scmp.lt.s32.totalorder %s18, 3
      %p291 = pnand %p289, %p290
      %p292 = pneg %p291
      // Predicated region
      $region53: #{tpu_custom_call.1} parent=5 // pred_check
        _
      $region54: #{tpu_custom_call.1} parent=5 // pred_check_branch
        %294 = sbr.rel (%p291) target = $region56
      $region55: #{tpu_custom_call.1} parent=5 // pred_region
        %s295 = ssub.s32 %s18, 1
        %p296 = scmp.lt.s32.totalorder %s23, 1
        %s297 = scalar_select %p296, %s23, 1
        %s298 = smul.addr %s297, 2
        %s299 = smul.addr %s298, 2
        %s300 = scalar_lea.vmem %s0, %s299
        %p301 = pneg %p44
        %p302 = pneg %p41
        %p303 = pneg %p65
        %p304 = pneg %p62
        %p305 = pneg %p86
        %p306 = pneg %p83
        %p307 = pneg %p107
        %p308 = pneg %p104
        %p309 = pneg %p128
        %p310 = pneg %p125
        %p311 = pneg %p149
        %p312 = pneg %p146
        %p313 = pneg %p170
        %p314 = pneg %p167
        %p315 = pneg %p191
        %p316 = pneg %p188
        %p317 = pneg %p212
        %p318 = pneg %p209
        %p319 = pneg %p238
        %p320 = pneg %p235
        %s321 = sand.u32 %s225, 1
        %s322 = scalar_lea.sflag [#allocation3], %s321
        %s323 = sand.u32 %s225, 1
        %s324 = smul.addr %s323, 32
        %s325 = scalar_lea.vmem [#allocation2], %s324
        %p326 = scmp.lt.s32.totalorder %s23, 1
        %s327 = scalar_select %p326, %s23, 1
        %s328 = smul.addr %s327, 2
        %s329 = smul.addr %s328, 2
        %s330 = scalar_lea.vmem %s0, %s329
        %v332 = vld [vmem:[%s330] sm:$0xf]
        %v335 = vunpack.c.l.s4 1983009808
        %v336 = vunpack.c.0.s8 %v335
        %v337 = vlaneseq
        %v338 = vshrl.u32 %v337, 7
        %v339 = vsub.s32 %v336, %v338
        %v340 = vrot.slane %v332, %v339
        %v341 = vcombine.high %v340, %v340
        %v342 = vcombine.low %v332, %v332
        %v344 = vunpack.c.l.s4 1983009808
        %v345 = vunpack.c.0.s8 %v344
        %v346 = vlaneseq
        %v347 = vshrl.u32 %v346, 7
        %v348 = vsub.s32 %v345, %v347
        %v349 = vrot.slane %v342, %v348
        %v350 = vcombine.high %v349, %v349
        %351 = vrot.lane.b32.xlu0 %v349, 127
        %v352 = vpop.permute.xlu0 %351
        %353 = vrot.lane.b32.xlu0 %v350, 127
        %v354 = vpop.permute.xlu0 %353
        %vm355 = vcmask 1039360
        %v356 = vsel %vm355, %v352, %v354
        %v357 = vcombine.low %v340, %v340
        %358 = vrot.lane.b32.xlu0 %v357, 126
        %v359 = vpop.permute.xlu0 %358
        %360 = vrot.lane.b32.xlu0 %v340, 126
        %v361 = vpop.permute.xlu0 %360
        %vm362 = vcmask 1031168
        %v363 = vsel %vm362, %v359, %v361
        %v364 = vcombine.low %v349, %v349
        %365 = vrot.lane.b32.xlu0 %v364, 112
        %v366 = vpop.permute.xlu0 %365
        %367 = vrot.lane.b32.xlu0 %v349, 112
        %v368 = vpop.permute.xlu0 %367
        %vm369 = vcmask 916480
        %v370 = vsel %vm369, %v366, %v368
        %371 = vrot.lane.b32.xlu0 %v340, 111
        %v372 = vpop.permute.xlu0 %371
        %373 = vrot.lane.b32.xlu0 %v341, 111
        %v374 = vpop.permute.xlu0 %373
        %vm375 = vcmask 908288
        %v376 = vsel %vm375, %v372, %v374
        %377 = vrot.lane.b32.xlu0 %v349, 110
        %v378 = vpop.permute.xlu0 %377
        %379 = vrot.lane.b32.xlu0 %v350, 110
        %v380 = vpop.permute.xlu0 %379
        %vm381 = vcmask 900096
        %v382 = vsel %vm381, %v378, %v380
        %383 = vrot.lane.b32.xlu0 %v357, 96
        %v384 = vpop.permute.xlu0 %383
        %385 = vrot.lane.b32.xlu0 %v340, 96
        %v386 = vpop.permute.xlu0 %385
        %vm387 = vcmask 785408
        %v388 = vsel %vm387, %v384, %v386
        %389 = vrot.lane.b32.xlu0 %v364, 95
        %v390 = vpop.permute.xlu0 %389
        %391 = vrot.lane.b32.xlu0 %v349, 95
        %v392 = vpop.permute.xlu0 %391
        %vm393 = vcmask 777216
        %v394 = vsel %vm393, %v390, %v392
        %395 = vrot.lane.b32.xlu0 %v340, 94
        %v396 = vpop.permute.xlu0 %395
        %397 = vrot.lane.b32.xlu0 %v341, 94
        %v398 = vpop.permute.xlu0 %397
        %vm399 = vcmask 769024
        %v400 = vsel %vm399, %v396, %v398
        %vm401 = vcmask 1041408
        %v404 = vsel %vm401, %v340, %v356
        %v407 = vsel %vm401, %v341, %v354
        %vm408 = vcmask 1043456
        %v410 = vsel %vm408, %v404, %v363
        %v412 = vsel %vm408, %v407, %v361
        %vm413 = vcmask 1045504
        %v415 = vsel %vm413, %v410, %v370
        %v418 = vsel %vm413, %v412, %v368
        %v422 = vsel %vm401, %v376, %v382
        %v425 = vsel %vm401, %v374, %v380
        %v427 = vsel %vm408, %v422, %v388
        %v429 = vsel %vm408, %v425, %v386
        %v431 = vsel %vm413, %v427, %v394
        %v434 = vsel %vm413, %v429, %v392
        %v436 = vld [vmem:[%s1] sm:$0xf]
        %v437 = vld [vmem:[%s2] sm:$0xff]
        %439 = vset.pattern.permute.xlu0 0
        %440 = vperm.xlu0 %439, %v437
        %v441 = vpop.permute.xlu0 %440
        %vm443 = vcmask 293888
        %v445 = vsel %vm443, %v436, 0
        %v448 = vsel %vm401, %v400, 0
        %v451 = vsel %vm401, %v398, 0
        %453 = vmatprep.subr.bf16.mxu0 %v418
        %454 = vmatpush1.bf16.msra.mxu0 %v415
        %455 = vmatprep.subr.bf16.mxu0 %v434
        %456 = vmatpush1.bf16.msra.mxu0 %v431
        %457 = vmatprep.subr.bf16.mxu0 %v451
        %458 = vmatpush1.bf16.msra.mxu0 %v448
        %459 = vmatprep.subr.bf16.mxu0 0
        %460 = vmatpush1.bf16.msra.mxu0 0
        %461 = vmatprep.subr.bf16.mxu0 0
        %462 = vmatpush1.bf16.msra.mxu0 0
        %463 = vmatprep.subr.bf16.mxu0 0
        %464 = vmatpush1.bf16.msra.mxu0 0
        %465 = vmatprep.subr.bf16.mxu0 0
        %466 = vmatpush1.bf16.msra.mxu0 0
        %467 = vmatprep.subr.bf16.mxu0 0
        %468 = vmatpush1.bf16.msra.mxu0 0
        %469 = vmatprep.subr.bf16.mxu0 0
        %470 = vmatpush1.bf16.msra.mxu0 0
        %471 = vmatprep.subr.bf16.mxu0 0
        %472 = vmatpush1.bf16.msra.mxu0 0
        %473 = vmatprep.subr.bf16.mxu0 0
        %474 = vmatpush1.bf16.msra.mxu0 0
        %475 = vmatprep.subr.bf16.mxu0 0
        %476 = vmatpush1.bf16.msra.mxu0 0
        %477 = vmatprep.subr.bf16.mxu0 0
        %478 = vmatpush1.bf16.msra.mxu0 0
        %479 = vmatprep.subr.bf16.mxu0 0
        %480 = vmatpush1.bf16.msra.mxu0 0
        %481 = vmatprep.subr.bf16.mxu0 0
        %482 = vmatpush1.bf16.msra.mxu0 0
        %483 = vmatprep.subr.bf16.mxu0 0
        %484 = vmatpush1.bf16.msra.mxu0 0
        %485 = vmatprep.mubr.bf16.mxu0 0
        %486 = vmatmul.mubr.bf16.gmra.mrb[0].mxu0 %v445
        %v487 = vpop.f32.mrb[0].mxu0
        %v488 = vadd.f32 %v441, %v487
        %v489 = vpop.f32.mrb[0].mxu0
        %v490 = vadd.f32 %v441, %v489
        %v491 = vpop.f32.mrb[0].mxu0
        %v492 = vpop.f32.mrb[0].mxu0
        %493 = vdwg.mxu0
        %v494 = vmul.f32 %v488, 0.1
        %v495 = vmul.f32 %v490, 0.1
        %v496 = vmax.f32 %v488, %v494
        %v497 = vmax.f32 %v490, %v495
        %v498 = vpack.c.bf16 %v496, %v496
        %v499 = vpack.c.bf16 %v497, %v497
        %v502 = vrot.slane %v498, 4
        %v503 = vrot.slane %v499, 4
        %504 = vrot.lane.b32.xlu0 %v502, 127
        %v505 = vpop.permute.xlu0 %504
        %506 = vrot.lane.b32.xlu0 %v503, 127
        %v507 = vpop.permute.xlu0 %506
        %v508 = vsel %vm355, %v505, %v507
        %509 = vrot.lane.b32.xlu0 %v498, 126
        %v510 = vpop.permute.xlu0 %509
        %511 = vrot.lane.b32.xlu0 %v499, 126
        %v512 = vpop.permute.xlu0 %511
        %v513 = vsel %vm362, %v510, %v512
        %514 = vrot.lane.b32.xlu0 %v502, 112
        %v515 = vpop.permute.xlu0 %514
        %516 = vrot.lane.b32.xlu0 %v503, 112
        %v517 = vpop.permute.xlu0 %516
        %v518 = vsel %vm369, %v515, %v517
        %519 = vrot.lane.b32.xlu0 %v498, 111
        %v520 = vpop.permute.xlu0 %519
        %521 = vrot.lane.b32.xlu0 %v499, 111
        %v522 = vpop.permute.xlu0 %521
        %v523 = vsel %vm375, %v520, %v522
        %524 = vrot.lane.b32.xlu0 %v502, 110
        %v525 = vpop.permute.xlu0 %524
        %526 = vrot.lane.b32.xlu0 %v503, 110
        %v527 = vpop.permute.xlu0 %526
        %v528 = vsel %vm381, %v525, %v527
        %529 = vrot.lane.b32.xlu0 %v498, 96
        %v530 = vpop.permute.xlu0 %529
        %531 = vrot.lane.b32.xlu0 %v499, 96
        %v532 = vpop.permute.xlu0 %531
        %v533 = vsel %vm387, %v530, %v532
        %534 = vrot.lane.b32.xlu0 %v502, 95
        %v535 = vpop.permute.xlu0 %534
        %536 = vrot.lane.b32.xlu0 %v503, 95
        %v537 = vpop.permute.xlu0 %536
        %v538 = vsel %vm393, %v535, %v537
        %539 = vrot.lane.b32.xlu0 %v498, 94
        %v540 = vpop.permute.xlu0 %539
        %541 = vrot.lane.b32.xlu0 %v499, 94
        %v542 = vpop.permute.xlu0 %541
        %v543 = vsel %vm399, %v540, %v542
        %v546 = vsel %vm408, %v498, %v508
        %v550 = vsel %vm408, %v499, %v507
        %v554 = vsel %vm408, %v513, %v518
        %v558 = vsel %vm408, %v512, %v517
        %v562 = vsel %vm408, %v523, %v528
        %v566 = vsel %vm408, %v522, %v527
        %v570 = vsel %vm408, %v533, %v538
        %v574 = vsel %vm408, %v532, %v537
        %v576 = vld [vmem:[%s3] sm:$0xf]
        %v577 = vld [vmem:[%s3 + $0x4] sm:$0xf]
        %v578 = vld [vmem:[%s4] sm:$0xff]
        %v579 = vld [vmem:[%s4 + $0x8] sm:$0xff]
        %581 = vset.pattern.permute.xlu0 0
        %582 = vperm.xlu0 %581, %v578
        %v583 = vpop.permute.xlu0 %582
        %586 = vset.pattern.permute.xlu0 0
        %587 = vperm.xlu0 %586, %v579
        %v588 = vpop.permute.xlu0 %587
        %v592 = vunpack.c.l.b16 %v576
        %v593 = vunpack.c.l.b16 %v577
        %v594 = vpack.c.b16 %v593, %v592
        %vm595 = vcmask 588800
        %v597 = vsel %vm595, %v594, 0
        %v600 = vsel %vm408, %v543, 0
        %v603 = vsel %vm408, %v542, 0
        %605 = vmatprep.subr.bf16.mxu0 %v550
        %606 = vmatpush1.bf16.msra.mxu0 %v546
        %607 = vmatprep.subr.bf16.mxu0 %v558
        %608 = vmatpush1.bf16.msra.mxu0 %v554
        %609 = vmatprep.subr.bf16.mxu0 %v566
        %610 = vmatpush1.bf16.msra.mxu0 %v562
        %611 = vmatprep.subr.bf16.mxu0 %v574
        %612 = vmatpush1.bf16.msra.mxu0 %v570
        %613 = vmatprep.subr.bf16.mxu0 %v603
        %614 = vmatpush1.bf16.msra.mxu0 %v600
        %615 = vmatprep.subr.bf16.mxu0 0
        %616 = vmatpush1.bf16.msra.mxu0 0
        %617 = vmatprep.subr.bf16.mxu0 0
        %618 = vmatpush1.bf16.msra.mxu0 0
        %619 = vmatprep.subr.bf16.mxu0 0
        %620 = vmatpush1.bf16.msra.mxu0 0
        %621 = vmatprep.subr.bf16.mxu0 0
        %622 = vmatpush1.bf16.msra.mxu0 0
        %623 = vmatprep.subr.bf16.mxu0 0
        %624 = vmatpush1.bf16.msra.mxu0 0
        %625 = vmatprep.subr.bf16.mxu0 0
        %626 = vmatpush1.bf16.msra.mxu0 0
        %627 = vmatprep.subr.bf16.mxu0 0
        %628 = vmatpush1.bf16.msra.mxu0 0
        %629 = vmatprep.subr.bf16.mxu0 0
        %630 = vmatpush1.bf16.msra.mxu0 0
        %631 = vmatprep.subr.bf16.mxu0 0
        %632 = vmatpush1.bf16.msra.mxu0 0
        %633 = vmatprep.subr.bf16.mxu0 0
        %634 = vmatpush1.bf16.msra.mxu0 0
        %635 = vmatprep.subr.bf16.mxu0 0
        %636 = vmatpush1.bf16.msra.mxu0 0
        %637 = vmatprep.mubr.bf16.mxu0 0
        %638 = vmatmul.mubr.bf16.gmra.mrb[0].mxu0 %v597
        %v639 = vpop.f32.mrb[0].mxu0
        %v640 = vadd.f32 %v583, %v639
        %v641 = vpop.f32.mrb[0].mxu0
        %v642 = vadd.f32 %v583, %v641
        %v643 = vpop.f32.mrb[0].mxu0
        %v644 = vadd.f32 %v588, %v643
        %v645 = vpop.f32.mrb[0].mxu0
        %v646 = vadd.f32 %v588, %v645
        %647 = vdwg.mxu0
        %v648 = vmul.f32 %v640, 0.1
        %v649 = vmul.f32 %v642, 0.1
        %v650 = vmul.f32 %v644, 0.1
        %v651 = vmul.f32 %v646, 0.1
        %v652 = vmax.f32 %v640, %v648
        %v653 = vmax.f32 %v642, %v649
        %v654 = vmax.f32 %v644, %v650
        %v655 = vmax.f32 %v646, %v651
        %658 = vrot.lane.b32.xlu0 %v652, 124
        %v659 = vpop.permute.xlu0 %658
        %660 = vrot.lane.b32.xlu0 %v654, 124
        %v661 = vpop.permute.xlu0 %660
        %664 = vrot.lane.b32.xlu0 %v652, 120
        %v665 = vpop.permute.xlu0 %664
        %666 = vrot.lane.b32.xlu0 %v654, 120
        %v667 = vpop.permute.xlu0 %666
        %670 = vrot.lane.b32.xlu0 %v652, 116
        %v671 = vpop.permute.xlu0 %670
        %672 = vrot.lane.b32.xlu0 %v654, 116
        %v673 = vpop.permute.xlu0 %672
        %676 = vrot.lane.b32.xlu0 %v652, 112
        %v677 = vpop.permute.xlu0 %676
        %678 = vrot.lane.b32.xlu0 %v654, 112
        %v679 = vpop.permute.xlu0 %678
        %682 = vrot.lane.b32.xlu0 %v652, 108
        %v683 = vpop.permute.xlu0 %682
        %684 = vrot.lane.b32.xlu0 %v654, 108
        %v685 = vpop.permute.xlu0 %684
        %688 = vrot.lane.b32.xlu0 %v652, 104
        %v689 = vpop.permute.xlu0 %688
        %690 = vrot.lane.b32.xlu0 %v654, 104
        %v691 = vpop.permute.xlu0 %690
        %694 = vrot.lane.b32.xlu0 %v652, 100
        %v695 = vpop.permute.xlu0 %694
        %696 = vrot.lane.b32.xlu0 %v654, 100
        %v697 = vpop.permute.xlu0 %696
        %702 = vrot.lane.b32.xlu0 %v653, 96
        %v703 = vpop.permute.xlu0 %702
        %704 = vrot.lane.b32.xlu0 %v655, 96
        %v705 = vpop.permute.xlu0 %704
        %708 = vrot.lane.b32.xlu0 %v653, 92
        %v709 = vpop.permute.xlu0 %708
        %710 = vrot.lane.b32.xlu0 %v655, 92
        %v711 = vpop.permute.xlu0 %710
        %714 = vrot.lane.b32.xlu0 %v653, 88
        %v715 = vpop.permute.xlu0 %714
        %716 = vrot.lane.b32.xlu0 %v655, 88
        %v717 = vpop.permute.xlu0 %716
        %720 = vrot.lane.b32.xlu0 %v653, 84
        %v721 = vpop.permute.xlu0 %720
        %722 = vrot.lane.b32.xlu0 %v655, 84
        %v723 = vpop.permute.xlu0 %722
        %vm726 = vcmask 97280
        %v727 = vsel %vm726, %v652, %v659
        %v728 = vsel %vm726, %v654, %v661
        %vm729 = vcmask 195584
        %v730 = vsel %vm729, %v727, %v665
        %v731 = vsel %vm729, %v728, %v667
        %v732 = vsel %vm443, %v730, %v671
        %v733 = vsel %vm443, %v731, %v673
        %vm734 = vcmask 392192
        %v735 = vsel %vm734, %v732, %v677
        %v736 = vsel %vm734, %v733, %v679
        %vm737 = vcmask 490496
        %v738 = vsel %vm737, %v735, %v683
        %v739 = vsel %vm737, %v736, %v685
        %v740 = vsel %vm595, %v738, %v689
        %v741 = vsel %vm595, %v739, %v691
        %vm742 = vcmask 687104
        %v743 = vsel %vm742, %v740, %v695
        %v744 = vsel %vm742, %v741, %v697
        %vm745 = vcmask 785408
        %v746 = vsel %vm745, %v743, %v703
        %v747 = vsel %vm745, %v744, %v705
        %vm748 = vcmask 883712
        %v749 = vsel %vm748, %v746, %v709
        %v750 = vsel %vm748, %v747, %v711
        %vm751 = vcmask 982016
        %v752 = vsel %vm751, %v749, %v715
        %v753 = vsel %vm751, %v750, %v717
        %vm754 = vcmask 31744
        %v755 = vsel %vm754, %v715, %v721
        %v756 = vsel %vm754, %v717, %v723
        %vm757 = vcmask 130048
        %v758 = vsel %vm757, %v755, 0.0
        %v759 = vadd.f32 %v752, %v758
        %760 = vadd.xlane.f32.xlu0 %v759
        %v761 = vpop.xlane.xlu0 %760
        %v762 = vsel %vm757, %v756, 0.0
        %v763 = vadd.f32 %v753, %v762
        %764 = vadd.xlane.f32.xlu0 %v763
        %v765 = vpop.xlane.xlu0 %764
        %v766 = vrcp.pop 144.0
        %v767 = vmul.f32 %v761, %v766
        %v768 = vmul.f32 %v765, %v766
        %v769 = vld [vmem:[%s5] sm:$0xff]
        %v770 = vld [vmem:[%s5 + $0x8] sm:$0xff]
        %v771 = vmul.f32 %v769, %v767
        %v772 = vmul.f32 %v770, %v768
        %vm773 = vcmask 15360
        %v774 = vsel %vm773, %v771, 0.0
        %v775 = vsel %vm773, %v772, 0.0
        %v776 = vadd.f32 %v774, %v775
        %v777 = vrot.slane %v776, 4
        %v778 = vadd.f32 %v776, %v777
        %v779 = vrot.slane %v778, 2
        %v780 = vadd.f32 %v778, %v779
        %v781 = vrot.slane %v780, 1
        %v782 = vadd.f32 %v780, %v781
        %v783 = vld [vmem:[%s6] sm:$0x1]
        %v784 = vadd.f32 %v782, %v783
        %v785 = vmax.f32 %v784, 0.0
        %v786 = vld [vmem:[%s7] sm:$0xff]
        %v787 = vld [vmem:[%s7 + $0x8] sm:$0xff]
        %v788 = vlaneseq
        %v789 = vshrl.u32 %v788, 7
        %v790 = vsub.s32 0, %v789
        %v791 = vrot.slane %v785, %v790
        %v792 = vmul.f32 %v786, %v791
        %v793 = vmul.f32 %v787, %v791
        %v794 = vsel %vm773, %v792, 0.0
        %795 = vadd.xlane.f32.xlu0 %v794
        %v796 = vpop.xlane.xlu0 %795
        %v797 = vsel %vm773, %v793, 0.0
        %798 = vadd.xlane.f32.xlu0 %v797
        %v799 = vpop.xlane.xlu0 %798
        %v800 = vld [vmem:[%s8] sm:$0xff]
        %v801 = vld [vmem:[%s8 + $0x8] sm:$0xff]
        %v802 = vadd.f32 %v796, %v800
        %v803 = vadd.f32 %v799, %v801
        %v804 = vxor.u32 %v802, 2147483648
        %v805 = vxor.u32 %v803, 2147483648
        %v806 = vmul.f32 %v804, 1.442695
        %v807 = vpow.pop %v806
        %v808 = vmul.f32 %v805, 1.442695
        %v809 = vpow.pop %v808
        %v810 = vadd.f32 %v807, 1.0
        %v811 = vadd.f32 %v809, 1.0
        %v812 = vrcp.pop %v810
        %v813 = vmul.f32 1.0, %v812
        %v814 = vrcp.pop %v811
        %v815 = vmul.f32 1.0, %v814
        %817 = vset.pattern.permute.xlu0 0
        %818 = vperm.xlu0 %817, %v813
        %v819 = vpop.permute.xlu0 %818
        %822 = vset.pattern.permute.xlu0 0
        %823 = vperm.xlu0 %822, %v815
        %v824 = vpop.permute.xlu0 %823
        %v826 = vmul.f32 %v752, %v819
        %v827 = vmul.f32 %v755, %v819
        %v828 = vmul.f32 %v753, %v824
        %v829 = vmul.f32 %v756, %v824
        %830 = vst [vmem:[%s325] sm:$0xff] %v826
        %831 = vst.msk [vmem:[%s325 + $0x8] sm:$0xff] %vm757, %v827
        %832 = vst [vmem:[%s325 + $0x10] sm:$0xff] %v828
        %833 = vst.msk [vmem:[%s325 + $0x18] sm:$0xff] %vm757, %v829
        %s834 = sand.u32 %s225, 1
        %s835 = scalar_lea.sflag [#allocation3], %s834
        %s836 = sand.u32 %s225, 1
        %s837 = smul.addr %s836, 32
        %s838 = scalar_lea.vmem [#allocation2], %s837
        // Predicated region
        $region57: #{tpu_custom_call.1} parent=55 // pred_check
          %p839 = pneg %p235
        $region58: #{tpu_custom_call.1} parent=55 // pred_check_branch
          %841 = sbr.rel (%p839) target = $region60
        $region59: #{tpu_custom_call.1} parent=55 // pred_region
          %s843 = ssub.s32 512, 512
          %844 = vsyncadd %s835, %s843
          %s845 = smul.addr %s23, 4
          %s846 = smul.addr %s845, 128
          %s847 = scalar_lea.hbm %s9, %s846
          %s848 = sshll.u32 %s838, 4
          %s849 = int_to_ptr.vmem [resolvable:$true] %s848
          %854 = dma.vmem_to_hbm [thread:$0]  %s849, 512, %s847, %s835, 256, 256, 16
        $region60: #{tpu_custom_call.1} parent=55 // pred_fallthru
          _
      $region56: #{tpu_custom_call.1} parent=5 // pred_fallthru
        _
      %p855 = scmp.le.s32.totalorder 2, %s18
      // Predicated region
      $region61: #{tpu_custom_call.1} parent=5 // pred_check
        %p856 = pneg %p855
      $region62: #{tpu_custom_call.1} parent=5 // pred_check_branch
        %858 = sbr.rel (%p856) target = $region64
      $region63: #{tpu_custom_call.1} parent=5 // pred_region
        %s859 = ssub.s32 %s18, 2
        // Predicated region
        $region65: #{tpu_custom_call.1} parent=63 // pred_check
          %p860 = pneg %p241
        $region66: #{tpu_custom_call.1} parent=63 // pred_check_branch
          %862 = sbr.rel (%p860) target = $region68
        $region67: #{tpu_custom_call.1} parent=63 // pred_region
          %s863 = sand.u32 %s226, 1
          %s864 = scalar_lea.sflag [#allocation3], %s863
          %s865 = sand.u32 %s226, 1
          %s866 = smul.addr %s865, 32
          %s867 = scalar_lea.vmem [#allocation2], %s866
          %868 = dma.done %s864, 512
        $region68: #{tpu_custom_call.1} parent=63 // pred_fallthru
          _
      $region64: #{tpu_custom_call.1} parent=5 // pred_fallthru
        _
    $region6: #{tpu_custom_call.1} parent=1 // loop_footer
      %s22 = sadd.s32 1, %s18
    $region7: #{tpu_custom_call.1} parent=1 // loop_footer_branch
      %17 = sbr.rel target = $region3
    $region8: #{tpu_custom_call.1} parent=1 // loop_exit
      _
    %869 = vsyncpa [#allocation3], 1
    %s870 = scalar_lea.sflag [#allocation3], 1
    %871 = vsyncpa %s870, 1

</llo_original>
